<compile_context>
chip_gen: v5e
topology: v5e:2x2
jax: 0.10.0
libtpu: 0.0.40
codegen_flags: <defaults>
</compile_context>

<pallas_src>
import jax
import jax.numpy as jnp
from jax import lax
from jax.experimental import pallas as pl
from jax.experimental.pallas import tpu as pltpu


def _ceil_to(x, m):
    return ((x + m - 1) // m) * m


# ----------------------------- Pallas kernel ------------------------------

def _joint_rnnt_kernel(tgt_ref,                      # SMEM  [B, U] int32 (scalar prefetch)
                       enc_ref,                      # VMEM  [1, tT, E]   (encoder LSTM out)
                       dec_ref,                      # VMEM  [1, U1, D]   (decoder LSTM out)
                       we_ref, wd_ref, b1_ref,       # [E, J], [D, J], [1, J]  (proj folded in)
                       w2_ref, b2_ref,               # [J, V], [1, V]
                       lpb_ref, lpl_ref,             # [1, tT, U1] outputs (blank / label log-probs)
                       hd_sc,                        # VMEM scratch [U1, J] f32  (T-invariant)
                       sel_sc):                      # VMEM scratch [U1, V] f32  (T-invariant)
    b = pl.program_id(0)
    t_idx = pl.program_id(1)
    U1 = dec_ref.shape[1]
    tT = enc_ref.shape[1]
    J = we_ref.shape[1]
    V = w2_ref.shape[1]
    U = tgt_ref.shape[1]

    lane_v = lax.broadcasted_iota(jnp.int32, (1, V), 1)

    # ---- per-batch-row (T-invariant) work, cached across T tiles ----
    @pl.when(t_idx == 0)
    def _():
        d = dec_ref[0]                                                          # [U1, D]
        hd_sc[...] = (jnp.dot(d, wd_ref[...], preferred_element_type=jnp.float32)
                      + b1_ref[...])                                            # [U1, J] f32
        # one-hot label-selection rows (blank=0 convention; padded last row -> zeros).
        for u in range(U1):
            if u < U:
                sel_sc[u:u + 1, :] = (lane_v == tgt_ref[b, u]).astype(jnp.float32)
            else:
                sel_sc[u:u + 1, :] = jnp.zeros((1, V), jnp.float32)

    # ---- encoder mixing for this time tile (single MXU matmul) ----
    e = enc_ref[0]                                                              # [tT, E]
    he = jnp.dot(e, we_ref[...], preferred_element_type=jnp.float32)            # [tT, J] f32

    # ---- joint pre-activations for all (u, t) rows at once (broadcast, no scratch) ----
    h3 = jnp.tanh(hd_sc[...][:, None, :] + he[None, :, :])                      # [U1, tT, J] f32
    h2 = h3.reshape(U1 * tT, J).astype(w2_ref.dtype)                            # [U1*tT, J]

    # ---- ONE fused MXU matmul over all (u, t) rows of the tile ----
    logits = (jnp.dot(h2, w2_ref[...], preferred_element_type=jnp.float32)
              + b2_ref[...])                                                    # [U1*tT, V] f32

    # ---- log-softmax stats over the whole slab (one max / exp / sum / log) ----
    # TODO(synk): for production vocab sizes (V in the thousands) tile the logsumexp over V
    # (online running max / sum) instead of holding the whole [U1*tT, V] slab.
    m = jnp.max(logits, axis=-1, keepdims=True)
    z = logits - m
    lse = jnp.log(jnp.sum(jnp.exp(z), axis=-1, keepdims=True))                  # [U1*tT, 1]

    blank_col = z[:, 0:1] - lse                                                 # [U1*tT, 1]
    sel_big = jnp.broadcast_to(sel_sc[...][:, None, :], (U1, tT, V)).reshape(U1 * tT, V)
    label_col = jnp.sum(z * sel_big, axis=-1, keepdims=True) - lse              # [U1*tT, 1]

    # ---- scatter the per-(u, t) scalars into the [tT, U1] output tile ----
    # (tiny data; static sublane slices + lane-u column stores, known to lower cleanly)
    for u in range(U1):
        lpb_ref[0, :, u:u + 1] = blank_col[u * tT:(u + 1) * tT, :]
        lpl_ref[0, :, u:u + 1] = label_col[u * tT:(u + 1) * tT, :]


def _pick_time_tile(T, U1, V, E, J, compute_bytes):
    """VMEM-aware time-tile size (multiple of 8). Keeps the fused logits/select slabs,
    the tanh intermediate and the pipeline buffers well inside scoped VMEM
    (v7x has only 64 MiB physical / 32 MiB default)."""
    budget = 8 * 1024 * 1024
    per_row = U1 * (2 * V * 4 + J * (4 + compute_bytes)) + 2 * E * compute_bytes
    cap = budget // max(per_row, 1)
    cap = max(8, min(512, (cap // 8) * 8))
    if T <= cap:
        return _ceil_to(T, 8)
    return cap


def joint_log_probs(enc, dec, targets, w_e, w_d, b1, w2, b2,
                    compute_dtype=jnp.float32):
    """Fused (projection-folded) JointNet + log-softmax + blank/label gather.

    enc: [B, T, E] encoder LSTM output (un-projected)
    dec: [B, U+1, D] decoder LSTM output (un-projected)
    targets: [B, U] int32 (scalar-prefetched into SMEM)
    Returns (lp_blank, lp_label) with layout [B, T, U+1] (consumed by the DP directly).
    """
    B, T, E = enc.shape
    _, U1, D = dec.shape
    J = w_e.shape[1]
    V = w2.shape[1]

    cbytes = jnp.dtype(compute_dtype).itemsize
    tT = _pick_time_tile(T, U1, V, E, J, cbytes)
    T_pad = _ceil_to(T, tT)
    if T_pad != T:
        enc = jnp.pad(enc, ((0, 0), (0, T_pad - T), (0, 0)))
    nT = T_pad // tT

    enc_c = enc.astype(compute_dtype)
    dec_c = dec.astype(compute_dtype)
    we_c = w_e.astype(compute_dtype)
    wd_c = w_d.astype(compute_dtype)
    w2_c = w2.astype(compute_dtype)

    # TODO(synk): for grid-invariant weight blocks, pipeline_mode=pl.Buffered(1) would
    # reclaim one buffer copy each on v7x's smaller VMEM.
    lpb, lpl = pl.pallas_call(
        _joint_rnnt_kernel,
        out_shape=(jax.ShapeDtypeStruct((B, T_pad, U1), jnp.float32),
                   jax.ShapeDtypeStruct((B, T_pad, U1), jnp.float32)),
        grid_spec=pltpu.PrefetchScalarGridSpec(
            num_scalar_prefetch=1,                       # int32 targets -> SMEM
            grid=(B, nT),
            in_specs=[
                pl.BlockSpec((1, tT, E), lambda b, t, tgt: (b, t, 0)),   # enc (T-tiled)
                pl.BlockSpec((1, U1, D), lambda b, t, tgt: (b, 0, 0)),   # dec (T-invariant)
                pl.BlockSpec((E, J), lambda b, t, tgt: (0, 0)),
                pl.BlockSpec((D, J), lambda b, t, tgt: (0, 0)),
                pl.BlockSpec((1, J), lambda b, t, tgt: (0, 0)),
                pl.BlockSpec((J, V), lambda b, t, tgt: (0, 0)),
                pl.BlockSpec((1, V), lambda b, t, tgt: (0, 0)),
            ],
            out_specs=(pl.BlockSpec((1, tT, U1), lambda b, t, tgt: (b, t, 0)),
                       pl.BlockSpec((1, tT, U1), lambda b, t, tgt: (b, t, 0))),
            scratch_shapes=[pltpu.VMEM((U1, J), jnp.float32),
                            pltpu.VMEM((U1, V), jnp.float32)],
        ),
        compiler_params=pltpu.CompilerParams(
            dimension_semantics=("parallel", "arbitrary"),
            vmem_limit_bytes=32 * 1024 * 1024),
    )(targets, enc_c, dec_c, we_c, wd_c, b1, w2_c, b2)
    return lpb[:, :T, :], lpl[:, :T, :]


# ------------------------- plain-JAX glue: LSTMs ----------------------------

def lstm_layer(x, p, reverse=False):
    B, _, _ = x.shape
    H = p['w_hh'].shape[1]
    xs = jnp.swapaxes(x, 0, 1)                       # [T, B, I]
    if reverse:
        xs = xs[::-1]

    def step(carry, xt):
        h, c = carry
        gates = xt @ p['w_ih'].T + h @ p['w_hh'].T + p['b_ih'] + p['b_hh']
        i, f, g, o = jnp.split(gates, 4, axis=-1)    # PyTorch gate order i,f,g,o
        i = jax.nn.sigmoid(i)
        f = jax.nn.sigmoid(f)
        g = jnp.tanh(g)
        o = jax.nn.sigmoid(o)
        c = f * c + i * g
        h = o * jnp.tanh(c)
        return (h, c), h

    init = (jnp.zeros((B, H), jnp.float32), jnp.zeros((B, H), jnp.float32))
    _, ys = lax.scan(step, init, xs)
    if reverse:
        ys = ys[::-1]
    return jnp.swapaxes(ys, 0, 1)


def lstm_stack(x, layers_p, bidirectional):
    out = x
    for dlist in layers_p:
        if bidirectional:
            fwd = lstm_layer(out, dlist[0], reverse=False)
            bwd = lstm_layer(out, dlist[1], reverse=True)
            out = jnp.concatenate([fwd, bwd], axis=-1)
        else:
            out = lstm_layer(out, dlist[0], reverse=False)
    # TODO(synk): inter-layer LSTM dropout (train-mode only in PyTorch) omitted (eval semantics).
    # TODO(synk): bi-LSTM runs over padded frames (unpacked nn.LSTM semantics, like the original).
    return out


# ------------------------------ RNNT loss DP --------------------------------

def rnnt_loss_from_logprobs(lp_blank, lp_label, t_lens, u_lens):
    """Standard RNN-T negative log-likelihood (mean over batch).
    lp_blank / lp_label: [B, T, U+1]."""
    B, T, U1 = lp_blank.shape

    def per_example(lpb, lpl, tl, ul):
        alpha0 = jnp.concatenate([jnp.zeros((1,), jnp.float32),
                                  jnp.cumsum(lpl[0, :U1 - 1])])            # [U1]

        def t_step(alpha_prev, t):
            first = alpha_prev[0] + lpb[t - 1, 0]

            def u_step(carry, u):
                a = jnp.logaddexp(alpha_prev[u] + lpb[t - 1, u],
                                  carry + lpl[t, u - 1])
                return a, a

            _, rest = lax.scan(u_step, first, jnp.arange(1, U1))
            alpha_t = jnp.concatenate([first[None], rest])
            return alpha_t, alpha_t

        _, alphas_rest = lax.scan(t_step, alpha0, jnp.arange(1, T))
        alphas = jnp.concatenate([alpha0[None, :], alphas_rest], axis=0)    # [T, U1]
        loglike = alphas[tl - 1, ul] + lpb[tl - 1, ul]
        return -loglike

    losses = jax.vmap(per_example)(lp_blank, lp_label, t_lens, u_lens)
    return jnp.mean(losses)


# ------------------------------- parameters ---------------------------------

def _uniform(key, shape, scale):
    return jax.random.uniform(key, shape, jnp.float32, -scale, scale)


def make_lstm_params(key, in_size, hidden, layers, bidirectional):
    dirs_n = 2 if bidirectional else 1
    scale = 1.0 / float(hidden) ** 0.5
    layers_p = []
    for l in range(layers):
        layer_in = in_size if l == 0 else hidden * dirs_n
        dlist = []
        for _ in range(dirs_n):
            key, k1, k2, k3, k4 = jax.random.split(key, 5)
            dlist.append(dict(
                w_ih=_uniform(k1, (4 * hidden, layer_in), scale),
                w_hh=_uniform(k2, (4 * hidden, hidden), scale),
                b_ih=_uniform(k3, (4 * hidden,), scale),
                b_hh=_uniform(k4, (4 * hidden,), scale)))
        layers_p.append(dlist)
    return key, layers_p


def make_params(key, cfg):
    V = cfg['vocab_size']
    assert cfg['joint_dim'] == cfg['dec_hidden'], "weight tying requires joint_dim == dec_hidden"
    key, enc_lstm = make_lstm_params(key, cfg['input_size'], cfg['enc_hidden'],
                                     cfg['enc_layers'], bidirectional=True)
    key, dec_lstm = make_lstm_params(key, cfg['dec_hidden'], cfg['dec_hidden'],
                                     cfg['dec_layers'], bidirectional=False)
    key, k1, k2, k3, k4, k5, k6, k7, k8, k9 = jax.random.split(key, 10)
    enc_proj_in = 2 * cfg['enc_hidden']
    se = 1.0 / enc_proj_in ** 0.5
    sd = 1.0 / cfg['dec_hidden'] ** 0.5
    sj = 1.0 / (cfg['enc_out'] + cfg['dec_out']) ** 0.5
    sp = 1.0 / cfg['joint_dim'] ** 0.5
    emb = 0.1 * jax.random.normal(k1, (V, cfg['dec_hidden']), jnp.float32)
    return dict(
        enc_lstm=enc_lstm, dec_lstm=dec_lstm,
        embedding=emb,
        enc_proj_w=_uniform(k2, (enc_proj_in, cfg['enc_out']), se),
        enc_proj_b=_uniform(k3, (1, cfg['enc_out']), se),
        dec_proj_w=_uniform(k4, (cfg['dec_hidden'], cfg['dec_out']), sd),
        dec_proj_b=_uniform(k5, (1, cfg['dec_out']), sd),
        joint_w1e=_uniform(k6, (cfg['enc_out'], cfg['joint_dim']), sj),
        joint_w1d=_uniform(k7, (cfg['dec_out'], cfg['joint_dim']), sj),
        joint_b1=_uniform(k8, (1, cfg['joint_dim']), sj),
        joint_w2=emb.T,                               # tied: project_layer.weight = embedding.weight
        joint_b2=_uniform(k9, (1, V), sp),
    )


# ------------------------------ full forward ---------------------------------

def transducer_forward(params, inputs_dict, targets_dict, use_pallas=True,
                       compute_dtype=jnp.float32):
    inputs = inputs_dict['inputs']
    inputs_length = inputs_dict['inputs_length']
    targets = targets_dict['targets']
    targets_length = targets_dict['targets_length']
    V = params['embedding'].shape[0]

    # AudioLSTMEncoder (bi-LSTM stack) and LabelLSTMencoder (embed + LSTM)
    enc_lstm_out = lstm_stack(inputs, params['enc_lstm'], bidirectional=True)
    concat_targets = jnp.pad(targets, ((0, 0), (1, 0)), constant_values=0)   # F.pad(targets,(1,0))
    dec_emb = params['embedding'][concat_targets]                            # [B, U+1, Dh]
    dec_lstm_out = lstm_stack(dec_emb, params['dec_lstm'], bidirectional=False)

    hp = lax.Precision.HIGHEST
    if use_pallas:
        # Fold the time-distributed enc/dec projection Linears into the joint mixing
        # weights (trace-time, tiny matmuls) -> one fused kernel, no intermediate states.
        W_e = jnp.dot(params['enc_proj_w'], params['joint_w1e'], precision=hp)   # [2He, J]
        W_d = jnp.dot(params['dec_proj_w'], params['joint_w1d'], precision=hp)   # [Dh, J]
        b1f = (params['joint_b1']
               + jnp.dot(params['enc_proj_b'], params['joint_w1e'], precision=hp)
               + jnp.dot(params['dec_proj_b'], params['joint_w1d'], precision=hp))
        lp_blank, lp_label = joint_log_probs(
            enc_lstm_out, dec_lstm_out, targets.astype(jnp.int32),
            W_e, W_d, b1f, params['joint_w2'], params['joint_b2'],
            compute_dtype=compute_dtype)
    else:
        # pure-JAX reference (same math as the PyTorch module, unfused, fp32 HIGHEST)
        enc_state = jnp.einsum('bti,io->bto', enc_lstm_out, params['enc_proj_w'],
                               precision=hp) + params['enc_proj_b']
        dec_state = jnp.einsum('bui,io->buo', dec_lstm_out, params['dec_proj_w'],
                               precision=hp) + params['dec_proj_b']
        he = jnp.einsum('bte,ej->btj', enc_state, params['joint_w1e'], precision=hp)
        hd = jnp.einsum('bud,dj->buj', dec_state, params['joint_w1d'], precision=hp) + params['joint_b1']
        h = jnp.tanh(he[:, :, None, :] + hd[:, None, :, :])                  # [B, T, U1, J]
        logits = jnp.einsum('btuj,jv->btuv', h, params['joint_w2'], precision=hp) + params['joint_b2']
        lp = jax.nn.log_softmax(logits, axis=-1)
        yoh = jax.nn.one_hot(targets, V, dtype=jnp.float32)
        yoh = jnp.pad(yoh, ((0, 0), (0, 1), (0, 0)))                         # [B, U1, V]
        lp_blank = lp[..., 0]                                                # [B, T, U1]
        lp_label = jnp.sum(lp * yoh[:, None, :, :], axis=-1)                 # [B, T, U1]

    return rnnt_loss_from_logprobs(lp_blank, lp_label,
                                   inputs_length.astype(jnp.int32),
                                   targets_length.astype(jnp.int32))


# ---------------------------------- main -------------------------------------

if __name__ == "__main__":
    cfg = dict(input_size=16, enc_hidden=32, enc_out=24, enc_layers=2,
               dec_hidden=32, vocab_size=40, dec_out=20, dec_layers=1,
               joint_dim=32)
    B, T, U = 2, 8, 4

    key = jax.random.PRNGKey(0)
    key, pkey, k1, k2 = jax.random.split(key, 4)
    params = make_params(pkey, cfg)

    inputs = jax.random.normal(k1, (B, T, cfg['input_size']), jnp.float32)
    targets = jax.random.randint(k2, (B, U), 1, cfg['vocab_size'], dtype=jnp.int32)
    inputs_length = jnp.array([T, T - 2], jnp.int32)
    targets_length = jnp.array([U, U - 1], jnp.int32)

    inputs_dict = {'inputs': inputs, 'inputs_length': inputs_length}
    targets_dict = {'targets': targets, 'targets_length': targets_length}

    # pure-JAX reference (module semantics)
    loss_ref = jax.block_until_ready(
        transducer_forward(params, inputs_dict, targets_dict, use_pallas=False))

    # Pallas path, fp32 matmul operands (tight check vs reference)
    loss_f32 = jax.block_until_ready(
        transducer_forward(params, inputs_dict, targets_dict, use_pallas=True,
                           compute_dtype=jnp.float32))

    # Pallas path, bf16 matmul operands / f32 accumulation (production MXU setting)
    loss_bf16 = jax.block_until_ready(
        transducer_forward(params, inputs_dict, targets_dict, use_pallas=True,
                           compute_dtype=jnp.bfloat16))

    assert bool(jnp.isfinite(loss_ref)), f"reference loss not finite: {loss_ref}"
    assert bool(jnp.isfinite(loss_f32)), f"pallas fp32 loss not finite: {loss_f32}"
    assert bool(jnp.isfinite(loss_bf16)), f"pallas bf16 loss not finite: {loss_bf16}"
    assert bool(jnp.allclose(loss_f32, loss_ref, rtol=1e-3, atol=1e-3)), (loss_f32, loss_ref)
    assert bool(jnp.allclose(loss_bf16, loss_ref, rtol=1e-1, atol=1.0)), (loss_bf16, loss_ref)
    print("KERNEL_OK")
</pallas_src>

<mosaic_0001>
module attributes {stable_mosaic.version = 11 : i64} {
  func.func @_joint_rnnt_kernel(%arg0: i32, %arg1: i32, %arg2: memref<2x4xi32, #tpu.memory_space<smem>>, %arg3: memref<1x8x64xf32, #tpu.memory_space<vmem>>, %arg4: memref<1x5x32xf32, #tpu.memory_space<vmem>>, %arg5: memref<64x32xf32, #tpu.memory_space<vmem>>, %arg6: memref<32x32xf32, #tpu.memory_space<vmem>>, %arg7: memref<1x32xf32, #tpu.memory_space<vmem>>, %arg8: memref<32x40xf32, #tpu.memory_space<vmem>>, %arg9: memref<1x40xf32, #tpu.memory_space<vmem>>, %arg10: memref<1x8x5xf32, #tpu.memory_space<vmem>>, %arg11: memref<1x8x5xf32, #tpu.memory_space<vmem>>, %arg12: memref<5x32xf32, #tpu.memory_space<vmem>>, %arg13: memref<5x40xf32, #tpu.memory_space<vmem>>) attributes {dimension_semantics = [#tpu.dimension_semantics<parallel>, #tpu.dimension_semantics<arbitrary>], iteration_bounds = array<i64: 2, 1>, scalar_prefetch = 1 : i64, scratch_operands = 2 : i64, tpu.core_type = #tpu.core_type<tc>, window_params = [{transform_indices = @transform_0, window_bounds = array<i64: 1, 8, 64>}, {transform_indices = @transform_1, window_bounds = array<i64: 1, 5, 32>}, {pipeline_mode = #tpu.pipeline_mode<synchronous>, transform_indices = @transform_2, window_bounds = array<i64: 64, 32>}, {pipeline_mode = #tpu.pipeline_mode<synchronous>, transform_indices = @transform_3, window_bounds = array<i64: 32, 32>}, {pipeline_mode = #tpu.pipeline_mode<synchronous>, transform_indices = @transform_4, window_bounds = array<i64: 1, 32>}, {pipeline_mode = #tpu.pipeline_mode<synchronous>, transform_indices = @transform_5, window_bounds = array<i64: 32, 40>}, {pipeline_mode = #tpu.pipeline_mode<synchronous>, transform_indices = @transform_6, window_bounds = array<i64: 1, 40>}, {transform_indices = @transform_7, window_bounds = array<i64: 1, 8, 5>}, {transform_indices = @transform_8, window_bounds = array<i64: 1, 8, 5>}]} {
    %0 = tpu.iota {dimensions = array<i32: 1>} : vector<1x40xi32>
    %c0_i32 = arith.constant 0 : i32
    %1 = arith.cmpi eq, %arg1, %c0_i32 : i32
    %2 = arith.extui %1 : i1 to i32
    %c0_i32_0 = arith.constant 0 : i32
    %3 = arith.cmpi ne, %2, %c0_i32_0 : i32
    scf.if %3 {
      %c0_43 = arith.constant 0 : index
      %c0_44 = arith.constant 0 : index
      %c0_45 = arith.constant 0 : index
      %80 = vector.load %arg4[%c0_43, %c0_44, %c0_45] : memref<1x5x32xf32, #tpu.memory_space<vmem>>, vector<1x5x32xf32>
      %81 = vector.shape_cast %80 : vector<1x5x32xf32> to vector<5x32xf32>
      %c0_46 = arith.constant 0 : index
      %c0_47 = arith.constant 0 : index
      %82 = vector.load %arg6[%c0_46, %c0_47] : memref<32x32xf32, #tpu.memory_space<vmem>>, vector<32x32xf32>
      %cst_48 = arith.constant dense<0.000000e+00> : vector<5x32xf32>
      %83 = tpu.matmul %81, %82, %cst_48 {dimension_numbers = #tpu.dot_dimension_numbers<[1], [0], [0], [1], [0, 0, 1, 1], [], []>} : vector<5x32xf32>, vector<32x32xf32>, vector<5x32xf32> -> vector<5x32xf32>
      %c0_49 = arith.constant 0 : index
      %c0_50 = arith.constant 0 : index
      %84 = vector.load %arg7[%c0_49, %c0_50] : memref<1x32xf32, #tpu.memory_space<vmem>>, vector<1x32xf32>
      %85 = vector.broadcast %84 : vector<1x32xf32> to vector<5x32xf32>
      %86 = arith.addf %83, %85 : vector<5x32xf32>
      %c0_51 = arith.constant 0 : index
      %c0_52 = arith.constant 0 : index
      %87 = vector.load %arg12[%c0_51, %c0_52] : memref<5x32xf32, #tpu.memory_space<vmem>>, vector<5x32xf32>
      tpu.vector_store %arg12[%c0_51, %c0_52], %86 {strides = array<i32>} : memref<5x32xf32, #tpu.memory_space<vmem>>, vector<5x32xf32>,
      %88 = arith.index_cast %arg0 : i32 to index
      %c0_53 = arith.constant 0 : index
      %89 = memref.load %arg2[%88, %c0_53] : memref<2x4xi32, #tpu.memory_space<smem>>
      %90 = vector.broadcast %89 : i32 to vector<1x40xi32>
      %91 = arith.cmpi eq, %0, %90 : vector<1x40xi32>
      %92 = arith.extui %91 : vector<1x40xi1> to vector<1x40xi32>
      %93 = arith.sitofp %92 : vector<1x40xi32> to vector<1x40xf32>
      %c0_54 = arith.constant 0 : index
      %c0_55 = arith.constant 0 : index
      %94 = vector.load %arg13[%c0_54, %c0_55] : memref<5x40xf32, #tpu.memory_space<vmem>>, vector<1x40xf32>
      tpu.vector_store %arg13[%c0_54, %c0_55], %93 {strides = array<i32>} : memref<5x40xf32, #tpu.memory_space<vmem>>, vector<1x40xf32>,
      %95 = arith.index_cast %arg0 : i32 to index
      %c1_56 = arith.constant 1 : index
      %96 = memref.load %arg2[%95, %c1_56] : memref<2x4xi32, #tpu.memory_space<smem>>
      %97 = vector.broadcast %96 : i32 to vector<1x40xi32>
      %98 = arith.cmpi eq, %0, %97 : vector<1x40xi32>
      %99 = arith.extui %98 : vector<1x40xi1> to vector<1x40xi32>
      %100 = arith.sitofp %99 : vector<1x40xi32> to vector<1x40xf32>
      %c1_57 = arith.constant 1 : index
      %c0_58 = arith.constant 0 : index
      %101 = vector.load %arg13[%c1_57, %c0_58] : memref<5x40xf32, #tpu.memory_space<vmem>>, vector<1x40xf32>
      tpu.vector_store %arg13[%c1_57, %c0_58], %100 {strides = array<i32>} : memref<5x40xf32, #tpu.memory_space<vmem>>, vector<1x40xf32>,
      %102 = arith.index_cast %arg0 : i32 to index
      %c2_59 = arith.constant 2 : index
      %103 = memref.load %arg2[%102, %c2_59] : memref<2x4xi32, #tpu.memory_space<smem>>
      %104 = vector.broadcast %103 : i32 to vector<1x40xi32>
      %105 = arith.cmpi eq, %0, %104 : vector<1x40xi32>
      %106 = arith.extui %105 : vector<1x40xi1> to vector<1x40xi32>
      %107 = arith.sitofp %106 : vector<1x40xi32> to vector<1x40xf32>
      %c2_60 = arith.constant 2 : index
      %c0_61 = arith.constant 0 : index
      %108 = vector.load %arg13[%c2_60, %c0_61] : memref<5x40xf32, #tpu.memory_space<vmem>>, vector<1x40xf32>
      tpu.vector_store %arg13[%c2_60, %c0_61], %107 {strides = array<i32>} : memref<5x40xf32, #tpu.memory_space<vmem>>, vector<1x40xf32>,
      %109 = arith.index_cast %arg0 : i32 to index
      %c3_62 = arith.constant 3 : index
      %110 = memref.load %arg2[%109, %c3_62] : memref<2x4xi32, #tpu.memory_space<smem>>
      %111 = vector.broadcast %110 : i32 to vector<1x40xi32>
      %112 = arith.cmpi eq, %0, %111 : vector<1x40xi32>
      %113 = arith.extui %112 : vector<1x40xi1> to vector<1x40xi32>
      %114 = arith.sitofp %113 : vector<1x40xi32> to vector<1x40xf32>
      %c3_63 = arith.constant 3 : index
      %c0_64 = arith.constant 0 : index
      %115 = vector.load %arg13[%c3_63, %c0_64] : memref<5x40xf32, #tpu.memory_space<vmem>>, vector<1x40xf32>
      tpu.vector_store %arg13[%c3_63, %c0_64], %114 {strides = array<i32>} : memref<5x40xf32, #tpu.memory_space<vmem>>, vector<1x40xf32>,
      %cst_65 = arith.constant 0.000000e+00 : f32
      %116 = vector.broadcast %cst_65 : f32 to vector<1x40xf32>
      %c4_66 = arith.constant 4 : index
      %c0_67 = arith.constant 0 : index
      %117 = vector.load %arg13[%c4_66, %c0_67] : memref<5x40xf32, #tpu.memory_space<vmem>>, vector<1x40xf32>
      tpu.vector_store %arg13[%c4_66, %c0_67], %116 {strides = array<i32>} : memref<5x40xf32, #tpu.memory_space<vmem>>, vector<1x40xf32>,
    } else {
    }
    %c0 = arith.constant 0 : index
    %c0_1 = arith.constant 0 : index
    %c0_2 = arith.constant 0 : index
    %4 = vector.load %arg3[%c0, %c0_1, %c0_2] : memref<1x8x64xf32, #tpu.memory_space<vmem>>, vector<1x8x64xf32>
    %5 = vector.shape_cast %4 : vector<1x8x64xf32> to vector<8x64xf32>
    %c0_3 = arith.constant 0 : index
    %c0_4 = arith.constant 0 : index
    %6 = vector.load %arg5[%c0_3, %c0_4] : memref<64x32xf32, #tpu.memory_space<vmem>>, vector<64x32xf32>
    %cst = arith.constant dense<0.000000e+00> : vector<8x32xf32>
    %7 = tpu.matmul %5, %6, %cst {dimension_numbers = #tpu.dot_dimension_numbers<[1], [0], [0], [1], [0, 0, 1, 1], [], []>} : vector<8x64xf32>, vector<64x32xf32>, vector<8x32xf32> -> vector<8x32xf32>
    %c0_5 = arith.constant 0 : index
    %c0_6 = arith.constant 0 : index
    %8 = vector.load %arg12[%c0_5, %c0_6] : memref<5x32xf32, #tpu.memory_space<vmem>>, vector<5x32xf32>
    %9 = vector.shape_cast %8 : vector<5x32xf32> to vector<5x1x32xf32>
    %10 = vector.shape_cast %7 : vector<8x32xf32> to vector<1x8x32xf32>
    %11 = vector.broadcast %9 : vector<5x1x32xf32> to vector<5x8x32xf32>
    %12 = vector.broadcast %10 : vector<1x8x32xf32> to vector<5x8x32xf32>
    %13 = arith.addf %11, %12 : vector<5x8x32xf32>
    %14 = math.tanh %13 : vector<5x8x32xf32>
    %15 = vector.shape_cast %14 : vector<5x8x32xf32> to vector<40x32xf32>
    %c0_7 = arith.constant 0 : index
    %c0_8 = arith.constant 0 : index
    %16 = vector.load %arg8[%c0_7, %c0_8] : memref<32x40xf32, #tpu.memory_space<vmem>>, vector<32x40xf32>
    %cst_9 = arith.constant dense<0.000000e+00> : vector<40x40xf32>
    %17 = tpu.matmul %15, %16, %cst_9 {dimension_numbers = #tpu.dot_dimension_numbers<[1], [0], [0], [1], [0, 0, 1, 1], [], []>} : vector<40x32xf32>, vector<32x40xf32>, vector<40x40xf32> -> vector<40x40xf32>
    %c0_10 = arith.constant 0 : index
    %c0_11 = arith.constant 0 : index
    %18 = vector.load %arg9[%c0_10, %c0_11] : memref<1x40xf32, #tpu.memory_space<vmem>>, vector<1x40xf32>
    %19 = vector.broadcast %18 : vector<1x40xf32> to vector<40x40xf32>
    %20 = arith.addf %17, %19 : vector<40x40xf32>
    %cst_12 = arith.constant dense<0xFF800000> : vector<40xf32>
    %21 = vector.multi_reduction <maximumf>, %20, %cst_12 [1] : vector<40x40xf32> to vector<40xf32>
    %22 = vector.shape_cast %21 : vector<40xf32> to vector<40x1xf32>
    %23 = vector.broadcast %22 : vector<40x1xf32> to vector<40x40xf32>
    %24 = arith.subf %20, %23 : vector<40x40xf32>
    %25 = math.exp %24 : vector<40x40xf32>
    %cst_13 = arith.constant dense<0.000000e+00> : vector<40xf32>
    %26 = vector.multi_reduction <add>, %25, %cst_13 [1] : vector<40x40xf32> to vector<40xf32>
    %27 = vector.shape_cast %26 : vector<40xf32> to vector<40x1xf32>
    %28 = math.log %27 : vector<40x1xf32>
    %29 = vector.extract_strided_slice %24 {offsets = [0, 0], sizes = [40, 1], strides = [1, 1]} : vector<40x40xf32> to vector<40x1xf32>
    %30 = arith.subf %29, %28 : vector<40x1xf32>
    %c0_14 = arith.constant 0 : index
    %c0_15 = arith.constant 0 : index
    %31 = vector.load %arg13[%c0_14, %c0_15] : memref<5x40xf32, #tpu.memory_space<vmem>>, vector<5x40xf32>
    %32 = vector.shape_cast %31 : vector<5x40xf32> to vector<5x1x40xf32>
    %33 = vector.shape_cast %32 : vector<5x1x40xf32> to vector<5x1x40xf32>
    %34 = vector.broadcast %33 : vector<5x1x40xf32> to vector<5x8x40xf32>
    %35 = vector.shape_cast %34 : vector<5x8x40xf32> to vector<40x40xf32>
    %36 = arith.mulf %24, %35 : vector<40x40xf32>
    %cst_16 = arith.constant dense<0.000000e+00> : vector<40xf32>
    %37 = vector.multi_reduction <add>, %36, %cst_16 [1] : vector<40x40xf32> to vector<40xf32>
    %38 = vector.shape_cast %37 : vector<40xf32> to vector<40x1xf32>
    %39 = arith.subf %38, %28 : vector<40x1xf32>
    %40 = vector.extract_strided_slice %30 {offsets = [0, 0], sizes = [8, 1], strides = [1, 1]} : vector<40x1xf32> to vector<8x1xf32>
    %c0_17 = arith.constant 0 : index
    %c0_18 = arith.constant 0 : index
    %c0_19 = arith.constant 0 : index
    %41 = vector.load %arg10[%c0_17, %c0_18, %c0_19] : memref<1x8x5xf32, #tpu.memory_space<vmem>>, vector<1x8x1xf32>
    %42 = vector.shape_cast %41 : vector<1x8x1xf32> to vector<8x1xf32>
    %43 = vector.shape_cast %40 : vector<8x1xf32> to vector<1x8x1xf32>
    tpu.vector_store %arg10[%c0_17, %c0_18, %c0_19], %43 {strides = array<i32>} : memref<1x8x5xf32, #tpu.memory_space<vmem>>, vector<1x8x1xf32>,
    %44 = vector.extract_strided_slice %39 {offsets = [0, 0], sizes = [8, 1], strides = [1, 1]} : vector<40x1xf32> to vector<8x1xf32>
    %c0_20 = arith.constant 0 : index
    %c0_21 = arith.constant 0 : index
    %c0_22 = arith.constant 0 : index
    %45 = vector.load %arg11[%c0_20, %c0_21, %c0_22] : memref<1x8x5xf32, #tpu.memory_space<vmem>>, vector<1x8x1xf32>
    %46 = vector.shape_cast %45 : vector<1x8x1xf32> to vector<8x1xf32>
    %47 = vector.shape_cast %44 : vector<8x1xf32> to vector<1x8x1xf32>
    tpu.vector_store %arg11[%c0_20, %c0_21, %c0_22], %47 {strides = array<i32>} : memref<1x8x5xf32, #tpu.memory_space<vmem>>, vector<1x8x1xf32>,
    %48 = vector.extract_strided_slice %30 {offsets = [8, 0], sizes = [8, 1], strides = [1, 1]} : vector<40x1xf32> to vector<8x1xf32>
    %c0_23 = arith.constant 0 : index
    %c0_24 = arith.constant 0 : index
    %c1 = arith.constant 1 : index
    %49 = vector.load %arg10[%c0_23, %c0_24, %c1] : memref<1x8x5xf32, #tpu.memory_space<vmem>>, vector<1x8x1xf32>
    %50 = vector.shape_cast %49 : vector<1x8x1xf32> to vector<8x1xf32>
    %51 = vector.shape_cast %48 : vector<8x1xf32> to vector<1x8x1xf32>
    tpu.vector_store %arg10[%c0_23, %c0_24, %c1], %51 {strides = array<i32>} : memref<1x8x5xf32, #tpu.memory_space<vmem>>, vector<1x8x1xf32>,
    %52 = vector.extract_strided_slice %39 {offsets = [8, 0], sizes = [8, 1], strides = [1, 1]} : vector<40x1xf32> to vector<8x1xf32>
    %c0_25 = arith.constant 0 : index
    %c0_26 = arith.constant 0 : index
    %c1_27 = arith.constant 1 : index
    %53 = vector.load %arg11[%c0_25, %c0_26, %c1_27] : memref<1x8x5xf32, #tpu.memory_space<vmem>>, vector<1x8x1xf32>
    %54 = vector.shape_cast %53 : vector<1x8x1xf32> to vector<8x1xf32>
    %55 = vector.shape_cast %52 : vector<8x1xf32> to vector<1x8x1xf32>
    tpu.vector_store %arg11[%c0_25, %c0_26, %c1_27], %55 {strides = array<i32>} : memref<1x8x5xf32, #tpu.memory_space<vmem>>, vector<1x8x1xf32>,
    %56 = vector.extract_strided_slice %30 {offsets = [16, 0], sizes = [8, 1], strides = [1, 1]} : vector<40x1xf32> to vector<8x1xf32>
    %c0_28 = arith.constant 0 : index
    %c0_29 = arith.constant 0 : index
    %c2 = arith.constant 2 : index
    %57 = vector.load %arg10[%c0_28, %c0_29, %c2] : memref<1x8x5xf32, #tpu.memory_space<vmem>>, vector<1x8x1xf32>
    %58 = vector.shape_cast %57 : vector<1x8x1xf32> to vector<8x1xf32>
    %59 = vector.shape_cast %56 : vector<8x1xf32> to vector<1x8x1xf32>
    tpu.vector_store %arg10[%c0_28, %c0_29, %c2], %59 {strides = array<i32>} : memref<1x8x5xf32, #tpu.memory_space<vmem>>, vector<1x8x1xf32>,
    %60 = vector.extract_strided_slice %39 {offsets = [16, 0], sizes = [8, 1], strides = [1, 1]} : vector<40x1xf32> to vector<8x1xf32>
    %c0_30 = arith.constant 0 : index
    %c0_31 = arith.constant 0 : index
    %c2_32 = arith.constant 2 : index
    %61 = vector.load %arg11[%c0_30, %c0_31, %c2_32] : memref<1x8x5xf32, #tpu.memory_space<vmem>>, vector<1x8x1xf32>
    %62 = vector.shape_cast %61 : vector<1x8x1xf32> to vector<8x1xf32>
    %63 = vector.shape_cast %60 : vector<8x1xf32> to vector<1x8x1xf32>
    tpu.vector_store %arg11[%c0_30, %c0_31, %c2_32], %63 {strides = array<i32>} : memref<1x8x5xf32, #tpu.memory_space<vmem>>, vector<1x8x1xf32>,
    %64 = vector.extract_strided_slice %30 {offsets = [24, 0], sizes = [8, 1], strides = [1, 1]} : vector<40x1xf32> to vector<8x1xf32>
    %c0_33 = arith.constant 0 : index
    %c0_34 = arith.constant 0 : index
    %c3 = arith.constant 3 : index
    %65 = vector.load %arg10[%c0_33, %c0_34, %c3] : memref<1x8x5xf32, #tpu.memory_space<vmem>>, vector<1x8x1xf32>
    %66 = vector.shape_cast %65 : vector<1x8x1xf32> to vector<8x1xf32>
    %67 = vector.shape_cast %64 : vector<8x1xf32> to vector<1x8x1xf32>
    tpu.vector_store %arg10[%c0_33, %c0_34, %c3], %67 {strides = array<i32>} : memref<1x8x5xf32, #tpu.memory_space<vmem>>, vector<1x8x1xf32>,
    %68 = vector.extract_strided_slice %39 {offsets = [24, 0], sizes = [8, 1], strides = [1, 1]} : vector<40x1xf32> to vector<8x1xf32>
    %c0_35 = arith.constant 0 : index
    %c0_36 = arith.constant 0 : index
    %c3_37 = arith.constant 3 : index
    %69 = vector.load %arg11[%c0_35, %c0_36, %c3_37] : memref<1x8x5xf32, #tpu.memory_space<vmem>>, vector<1x8x1xf32>
    %70 = vector.shape_cast %69 : vector<1x8x1xf32> to vector<8x1xf32>
    %71 = vector.shape_cast %68 : vector<8x1xf32> to vector<1x8x1xf32>
    tpu.vector_store %arg11[%c0_35, %c0_36, %c3_37], %71 {strides = array<i32>} : memref<1x8x5xf32, #tpu.memory_space<vmem>>, vector<1x8x1xf32>,
    %72 = vector.extract_strided_slice %30 {offsets = [32, 0], sizes = [8, 1], strides = [1, 1]} : vector<40x1xf32> to vector<8x1xf32>
    %c0_38 = arith.constant 0 : index
    %c0_39 = arith.constant 0 : index
    %c4 = arith.constant 4 : index
    %73 = vector.load %arg10[%c0_38, %c0_39, %c4] : memref<1x8x5xf32, #tpu.memory_space<vmem>>, vector<1x8x1xf32>
    %74 = vector.shape_cast %73 : vector<1x8x1xf32> to vector<8x1xf32>
    %75 = vector.shape_cast %72 : vector<8x1xf32> to vector<1x8x1xf32>
    tpu.vector_store %arg10[%c0_38, %c0_39, %c4], %75 {strides = array<i32>} : memref<1x8x5xf32, #tpu.memory_space<vmem>>, vector<1x8x1xf32>,
    %76 = vector.extract_strided_slice %39 {offsets = [32, 0], sizes = [8, 1], strides = [1, 1]} : vector<40x1xf32> to vector<8x1xf32>
    %c0_40 = arith.constant 0 : index
    %c0_41 = arith.constant 0 : index
    %c4_42 = arith.constant 4 : index
    %77 = vector.load %arg11[%c0_40, %c0_41, %c4_42] : memref<1x8x5xf32, #tpu.memory_space<vmem>>, vector<1x8x1xf32>
    %78 = vector.shape_cast %77 : vector<1x8x1xf32> to vector<8x1xf32>
    %79 = vector.shape_cast %76 : vector<8x1xf32> to vector<1x8x1xf32>
    tpu.vector_store %arg11[%c0_40, %c0_41, %c4_42], %79 {strides = array<i32>} : memref<1x8x5xf32, #tpu.memory_space<vmem>>, vector<1x8x1xf32>,
    return
  }
  func.func @transform_0(%arg0: i32, %arg1: i32, %arg2: memref<2x4xi32, #tpu.memory_space<smem>>) -> (i32, i32, i32) {
    %c0_i32 = arith.constant 0 : i32
    %c0_i32_0 = arith.constant 0 : i32
    return %arg0, %arg1, %c0_i32 : i32, i32, i32
  }
  func.func @transform_1(%arg0: i32, %arg1: i32, %arg2: memref<2x4xi32, #tpu.memory_space<smem>>) -> (i32, i32, i32) {
    %c0_i32 = arith.constant 0 : i32
    %c0_i32_0 = arith.constant 0 : i32
    %c0_i32_1 = arith.constant 0 : i32
    return %arg0, %c0_i32, %c0_i32_0 : i32, i32, i32
  }
  func.func @transform_2(%arg0: i32, %arg1: i32, %arg2: memref<2x4xi32, #tpu.memory_space<smem>>) -> (i32, i32) {
    %c0_i32 = arith.constant 0 : i32
    %c0_i32_0 = arith.constant 0 : i32
    %c0_i32_1 = arith.constant 0 : i32
    return %c0_i32, %c0_i32_0 : i32, i32
  }
  func.func @transform_3(%arg0: i32, %arg1: i32, %arg2: memref<2x4xi32, #tpu.memory_space<smem>>) -> (i32, i32) {
    %c0_i32 = arith.constant 0 : i32
    %c0_i32_0 = arith.constant 0 : i32
    %c0_i32_1 = arith.constant 0 : i32
    return %c0_i32, %c0_i32_0 : i32, i32
  }
  func.func @transform_4(%arg0: i32, %arg1: i32, %arg2: memref<2x4xi32, #tpu.memory_space<smem>>) -> (i32, i32) {
    %c0_i32 = arith.constant 0 : i32
    %c0_i32_0 = arith.constant 0 : i32
    %c0_i32_1 = arith.constant 0 : i32
    return %c0_i32, %c0_i32_0 : i32, i32
  }
  func.func @transform_5(%arg0: i32, %arg1: i32, %arg2: memref<2x4xi32, #tpu.memory_space<smem>>) -> (i32, i32) {
    %c0_i32 = arith.constant 0 : i32
    %c0_i32_0 = arith.constant 0 : i32
    %c0_i32_1 = arith.constant 0 : i32
    return %c0_i32, %c0_i32_0 : i32, i32
  }
  func.func @transform_6(%arg0: i32, %arg1: i32, %arg2: memref<2x4xi32, #tpu.memory_space<smem>>) -> (i32, i32) {
    %c0_i32 = arith.constant 0 : i32
    %c0_i32_0 = arith.constant 0 : i32
    %c0_i32_1 = arith.constant 0 : i32
    return %c0_i32, %c0_i32_0 : i32, i32
  }
  func.func @transform_7(%arg0: i32, %arg1: i32, %arg2: memref<2x4xi32, #tpu.memory_space<smem>>) -> (i32, i32, i32) {
    %c0_i32 = arith.constant 0 : i32
    %c0_i32_0 = arith.constant 0 : i32
    return %arg0, %arg1, %c0_i32 : i32, i32, i32
  }
  func.func @transform_8(%arg0: i32, %arg1: i32, %arg2: memref<2x4xi32, #tpu.memory_space<smem>>) -> (i32, i32, i32) {
    %c0_i32 = arith.constant 0 : i32
    %c0_i32_0 = arith.constant 0 : i32
    return %arg0, %arg1, %c0_i32 : i32, i32, i32
  }
}

</mosaic_0001>

<llo_original>
// kernel: tpu_custom_call.1
$region0: #{tpu_custom_call.1}
  #allocation0 [shape = 'u32[]', space=smem, size = 0x4, offset = 0x4, fixed_abs, tag = 'smem constant byte address 0x4 - core index']
  #allocation1 [shape = 'u32[72,128]{1,0:T(1,128)}', space=vmem, size = 0x9000, scoped, tag = 'internal scratch']
  #allocation2 [shape = 'f32[5,32]{1,0:T(8,128)}', space=vmem, size = 0x1000, scoped, tag = 'scratch operand']
  #allocation3 [shape = 'f32[5,40]{1,0:T(8,128)}', space=vmem, size = 0x1000, scoped, tag = 'scratch operand']
  #allocation4 [shape = 's32[1]{0}', space=sflag, size = 0x4, scoped, tag = 'scoped memory for tpu_custom_call.1']
  #allocation5 [shape = 'u8[1024]{0}', space=smem, size = 0x400, scoped, tag = 'prefetched SMEM operand 0']
  %s0 = inlined_call_operand.vmem [shape: s32[2,4], index: 0, kind: input, shape index: {}]
  %s1 = inlined_call_operand.vmem [shape: f32[2,8,64], index: 1, kind: input, shape index: {}]
  %s2 = inlined_call_operand.vmem [shape: f32[2,5,32], index: 2, kind: input, shape index: {}]
  %s3 = inlined_call_operand.vmem [shape: f32[64,32], index: 3, kind: input, shape index: {}]
  %s4 = inlined_call_operand.vmem [shape: f32[32,32], index: 4, kind: input, shape index: {}]
  %s5 = inlined_call_operand.vmem [shape: f32[1,32], index: 5, kind: input, shape index: {}]
  %s6 = inlined_call_operand.vmem [shape: f32[32,40], index: 6, kind: input, shape index: {}]
  %s7 = inlined_call_operand.vmem [shape: f32[1,40], index: 7, kind: input, shape index: {}]
  %s8 = inlined_call_operand.vmem [shape: f32[2,8,5], index: 8, kind: output, shape index: {0}]
  %s9 = inlined_call_operand.vmem [shape: f32[2,8,5], index: 9, kind: output, shape index: {1}]
  %10 = xla_tuple %s8, %s9
  %s11 = sld [smem:[#allocation0]]
  $region73: #{tpu_custom_call.1} parent=0
    _
  %s13 = ssub.s32 1, %s11
  %s14 = scalar_select 0, %s13, %s11
  %s16 = sshll.u32 %s0, 4
  %s17 = int_to_ptr.vmem [resolvable:$true] %s16
  %19 = dma.vmem_to_smem %s17, 32, [#allocation5], [#allocation4]
  %21 = dma.done [#allocation4], 32
  %22 = sfence
  loop: start=0, step=1, limit=4
  $region2: #{tpu_custom_call.1} parent=0 // loop_pre_header
    _
  $region3: #{tpu_custom_call.1} parent=0 // loop_header
    %s24 = sphi 0, %s28
    %p25 = scmp.ge.s32.totalorder %s24, 4
    %s31 = sphi 0, %s43
    %s32 = sphi 0, %s39
    %s33 = sphi 0, %s31
    %s34 = sphi 0, %s32
    %s35 = sphi 0, %s33
    %s36 = sphi 0, %s34
    %s48 = sphi 0, %s50
    %s51 = sphi 0, %s48
    %s52 = sphi 0, %s51
    %s68 = sphi 0, %s52
    %s74 = sphi 0, %s76
    %s77 = sphi 0, %s74
    %s78 = sphi 0, %s77
    %s94 = sphi 0, %s78
    %s98 = sphi 0, %s98
    %s100 = sphi 0, %s98
    %s101 = sphi 0, %s100
    %s115 = sphi 0, %s101
    %s119 = sphi 0, %s119
    %s121 = sphi 0, %s119
    %s122 = sphi 0, %s121
    %s136 = sphi 0, %s122
    %s140 = sphi 0, %s140
    %s142 = sphi 0, %s140
    %s143 = sphi 0, %s142
    %s157 = sphi 0, %s143
    %s161 = sphi 0, %s161
    %s163 = sphi 0, %s161
    %s164 = sphi 0, %s163
    %s178 = sphi 0, %s164
    %s182 = sphi 0, %s182
    %s184 = sphi 0, %s182
    %s185 = sphi 0, %s184
    %s199 = sphi 0, %s185
    %s207 = sphi 0, %s209
    %s210 = sphi 0, %s207
    %s211 = sphi 0, %s210
    %s227 = sphi 0, %s211
    %s235 = sphi 0, %s237
    %s238 = sphi 0, %s235
    %s239 = sphi 0, %s238
    %s255 = sphi 0, %s239
  $region4: #{tpu_custom_call.1} parent=0 // loop_header_branch
    %27 = sbr.rel (%p25) target = $region8
  $region5: #{tpu_custom_call.1} parent=0 // loop_body
    %s29 = ssub.s32 %s24, 1
    %s30 = ssub.s32 %s24, 2
    %s37 = sadd.s32 1, %s32
    %p38 = scmp.ge.s32.totalorder %s37, 1
    %s39 = scalar_select %p38, 0, %s37
    %s40 = sadd.s32 1, %s31
    %s41 = scalar_select %p38, %s40, %s31
    %p42 = scmp.ge.s32.totalorder %s41, 2
    %s43 = scalar_select %p42, 0, %s41
    %s44 = ssub.s32 %s31, %s43
    %s45 = ssub.s32 %s32, %s39
    %s46 = sor.u32 %s44, %s45
    %p47 = scmp.eq.s32.totalorder %s46, 0
    %s49 = sadd.s32 %s48, 1
    %s50 = scalar_select %p47, %s48, %s49
    %p53 = pneg %p47
    %p54 = scmp.eq.s32.totalorder %s24, 1
    %p55 = por %p53, %p54
    %p56 = scmp.ne.s32.totalorder %s48, %s51
    %p57 = scmp.eq.s32.totalorder %s24, 0
    %p58 = por %p56, %p57
    %p59 = scmp.ne.s32.totalorder %s48, %s51
    %p60 = scmp.eq.s32.totalorder %s29, 1
    %p61 = por %p59, %p60
    %p62 = scmp.ne.s32.totalorder %s51, %s52
    %p63 = scmp.eq.s32.totalorder %s29, 0
    %p64 = por %p62, %p63
    %p65 = scmp.ne.s32.totalorder %s51, %s52
    %p66 = scmp.eq.s32.totalorder %s30, 1
    %p67 = por %p65, %p66
    %p69 = scmp.ne.s32.totalorder %s52, %s68
    %p70 = scmp.eq.s32.totalorder %s30, 0
    %p71 = por %p69, %p70
    %s72 = ssub.s32 %s31, %s43
    %p73 = scmp.eq.s32.totalorder %s72, 0
    %s75 = sadd.s32 %s74, 1
    %s76 = scalar_select %p73, %s74, %s75
    %p79 = pneg %p73
    %p80 = scmp.eq.s32.totalorder %s24, 1
    %p81 = por %p79, %p80
    %p82 = scmp.ne.s32.totalorder %s74, %s77
    %p83 = scmp.eq.s32.totalorder %s24, 0
    %p84 = por %p82, %p83
    %p85 = scmp.ne.s32.totalorder %s74, %s77
    %p86 = scmp.eq.s32.totalorder %s29, 1
    %p87 = por %p85, %p86
    %p88 = scmp.ne.s32.totalorder %s77, %s78
    %p89 = scmp.eq.s32.totalorder %s29, 0
    %p90 = por %p88, %p89
    %p91 = scmp.ne.s32.totalorder %s77, %s78
    %p92 = scmp.eq.s32.totalorder %s30, 1
    %p93 = por %p91, %p92
    %p95 = scmp.ne.s32.totalorder %s78, %s94
    %p96 = scmp.eq.s32.totalorder %s30, 0
    %p97 = por %p95, %p96
    %s99 = sadd.s32 %s98, 1
    %p102 = scmp.eq.s32.totalorder %s24, 1
    %p103 = scmp.ne.s32.totalorder %s98, %s100
    %p104 = scmp.eq.s32.totalorder %s24, 0
    %p105 = por %p103, %p104
    %p106 = scmp.ne.s32.totalorder %s98, %s100
    %p107 = scmp.eq.s32.totalorder %s29, 1
    %p108 = por %p106, %p107
    %p109 = scmp.ne.s32.totalorder %s100, %s101
    %p110 = scmp.eq.s32.totalorder %s29, 0
    %p111 = por %p109, %p110
    %p112 = scmp.ne.s32.totalorder %s100, %s101
    %p113 = scmp.eq.s32.totalorder %s30, 1
    %p114 = por %p112, %p113
    %p116 = scmp.ne.s32.totalorder %s101, %s115
    %p117 = scmp.eq.s32.totalorder %s30, 0
    %p118 = por %p116, %p117
    %s120 = sadd.s32 %s119, 1
    %p123 = scmp.eq.s32.totalorder %s24, 1
    %p124 = scmp.ne.s32.totalorder %s119, %s121
    %p125 = scmp.eq.s32.totalorder %s24, 0
    %p126 = por %p124, %p125
    %p127 = scmp.ne.s32.totalorder %s119, %s121
    %p128 = scmp.eq.s32.totalorder %s29, 1
    %p129 = por %p127, %p128
    %p130 = scmp.ne.s32.totalorder %s121, %s122
    %p131 = scmp.eq.s32.totalorder %s29, 0
    %p132 = por %p130, %p131
    %p133 = scmp.ne.s32.totalorder %s121, %s122
    %p134 = scmp.eq.s32.totalorder %s30, 1
    %p135 = por %p133, %p134
    %p137 = scmp.ne.s32.totalorder %s122, %s136
    %p138 = scmp.eq.s32.totalorder %s30, 0
    %p139 = por %p137, %p138
    %s141 = sadd.s32 %s140, 1
    %p144 = scmp.eq.s32.totalorder %s24, 1
    %p145 = scmp.ne.s32.totalorder %s140, %s142
    %p146 = scmp.eq.s32.totalorder %s24, 0
    %p147 = por %p145, %p146
    %p148 = scmp.ne.s32.totalorder %s140, %s142
    %p149 = scmp.eq.s32.totalorder %s29, 1
    %p150 = por %p148, %p149
    %p151 = scmp.ne.s32.totalorder %s142, %s143
    %p152 = scmp.eq.s32.totalorder %s29, 0
    %p153 = por %p151, %p152
    %p154 = scmp.ne.s32.totalorder %s142, %s143
    %p155 = scmp.eq.s32.totalorder %s30, 1
    %p156 = por %p154, %p155
    %p158 = scmp.ne.s32.totalorder %s143, %s157
    %p159 = scmp.eq.s32.totalorder %s30, 0
    %p160 = por %p158, %p159
    %s162 = sadd.s32 %s161, 1
    %p165 = scmp.eq.s32.totalorder %s24, 1
    %p166 = scmp.ne.s32.totalorder %s161, %s163
    %p167 = scmp.eq.s32.totalorder %s24, 0
    %p168 = por %p166, %p167
    %p169 = scmp.ne.s32.totalorder %s161, %s163
    %p170 = scmp.eq.s32.totalorder %s29, 1
    %p171 = por %p169, %p170
    %p172 = scmp.ne.s32.totalorder %s163, %s164
    %p173 = scmp.eq.s32.totalorder %s29, 0
    %p174 = por %p172, %p173
    %p175 = scmp.ne.s32.totalorder %s163, %s164
    %p176 = scmp.eq.s32.totalorder %s30, 1
    %p177 = por %p175, %p176
    %p179 = scmp.ne.s32.totalorder %s164, %s178
    %p180 = scmp.eq.s32.totalorder %s30, 0
    %p181 = por %p179, %p180
    %s183 = sadd.s32 %s182, 1
    %p186 = scmp.eq.s32.totalorder %s24, 1
    %p187 = scmp.ne.s32.totalorder %s182, %s184
    %p188 = scmp.eq.s32.totalorder %s24, 0
    %p189 = por %p187, %p188
    %p190 = scmp.ne.s32.totalorder %s182, %s184
    %p191 = scmp.eq.s32.totalorder %s29, 1
    %p192 = por %p190, %p191
    %p193 = scmp.ne.s32.totalorder %s184, %s185
    %p194 = scmp.eq.s32.totalorder %s29, 0
    %p195 = por %p193, %p194
    %p196 = scmp.ne.s32.totalorder %s184, %s185
    %p197 = scmp.eq.s32.totalorder %s30, 1
    %p198 = por %p196, %p197
    %p200 = scmp.ne.s32.totalorder %s185, %s199
    %p201 = scmp.eq.s32.totalorder %s30, 0
    %p202 = por %p200, %p201
    %s203 = ssub.s32 %s31, %s43
    %s204 = ssub.s32 %s32, %s39
    %s205 = sor.u32 %s203, %s204
    %p206 = scmp.eq.s32.totalorder %s205, 0
    %s208 = sadd.s32 %s207, 1
    %s209 = scalar_select %p206, %s207, %s208
    %p212 = pneg %p206
    %p213 = scmp.eq.s32.totalorder %s24, 1
    %p214 = por %p212, %p213
    %p215 = scmp.ne.s32.totalorder %s207, %s210
    %p216 = scmp.eq.s32.totalorder %s24, 0
    %p217 = por %p215, %p216
    %p218 = scmp.ne.s32.totalorder %s207, %s210
    %p219 = scmp.eq.s32.totalorder %s29, 1
    %p220 = por %p218, %p219
    %p221 = scmp.ne.s32.totalorder %s210, %s211
    %p222 = scmp.eq.s32.totalorder %s29, 0
    %p223 = por %p221, %p222
    %p224 = scmp.ne.s32.totalorder %s210, %s211
    %p225 = scmp.eq.s32.totalorder %s30, 1
    %p226 = por %p224, %p225
    %p228 = scmp.ne.s32.totalorder %s211, %s227
    %p229 = scmp.eq.s32.totalorder %s30, 0
    %p230 = por %p228, %p229
    %s231 = ssub.s32 %s31, %s43
    %s232 = ssub.s32 %s32, %s39
    %s233 = sor.u32 %s231, %s232
    %p234 = scmp.eq.s32.totalorder %s233, 0
    %s236 = sadd.s32 %s235, 1
    %s237 = scalar_select %p234, %s235, %s236
    %p240 = pneg %p234
    %p241 = scmp.eq.s32.totalorder %s24, 1
    %p242 = por %p240, %p241
    %p243 = scmp.ne.s32.totalorder %s235, %s238
    %p244 = scmp.eq.s32.totalorder %s24, 0
    %p245 = por %p243, %p244
    %p246 = scmp.ne.s32.totalorder %s235, %s238
    %p247 = scmp.eq.s32.totalorder %s29, 1
    %p248 = por %p246, %p247
    %p249 = scmp.ne.s32.totalorder %s238, %s239
    %p250 = scmp.eq.s32.totalorder %s29, 0
    %p251 = por %p249, %p250
    %p252 = scmp.ne.s32.totalorder %s238, %s239
    %p253 = scmp.eq.s32.totalorder %s30, 1
    %p254 = por %p252, %p253
    %p256 = scmp.ne.s32.totalorder %s239, %s255
    %p257 = scmp.eq.s32.totalorder %s30, 0
    %p258 = por %p256, %p257
    %p259 = scmp.le.s32.totalorder 1, %s24
    %p260 = scmp.lt.s32.totalorder %s24, 3
    %p261 = pnand %p259, %p260
    %p262 = pneg %p261
    // Predicated region
    $region9: #{tpu_custom_call.1} parent=5 // pred_check
      _
    $region10: #{tpu_custom_call.1} parent=5 // pred_check_branch
      %264 = sbr.rel (%p261) target = $region12
    $region11: #{tpu_custom_call.1} parent=5 // pred_region
      %s265 = ssub.s32 %s24, 1
      // Predicated region
      $region13: #{tpu_custom_call.1} parent=11 // pred_check
        %p266 = pneg %p111
      $region14: #{tpu_custom_call.1} parent=11 // pred_check_branch
        %268 = sbr.rel (%p266) target = $region16
      $region15: #{tpu_custom_call.1} parent=11 // pred_region
        _
      $region16: #{tpu_custom_call.1} parent=11 // pred_fallthru
        _
      // Predicated region
      $region17: #{tpu_custom_call.1} parent=11 // pred_check
        %p269 = pneg %p132
      $region18: #{tpu_custom_call.1} parent=11 // pred_check_branch
        %271 = sbr.rel (%p269) target = $region20
      $region19: #{tpu_custom_call.1} parent=11 // pred_region
        _
      $region20: #{tpu_custom_call.1} parent=11 // pred_fallthru
        _
      // Predicated region
      $region21: #{tpu_custom_call.1} parent=11 // pred_check
        %p272 = pneg %p153
      $region22: #{tpu_custom_call.1} parent=11 // pred_check_branch
        %274 = sbr.rel (%p272) target = $region24
      $region23: #{tpu_custom_call.1} parent=11 // pred_region
        _
      $region24: #{tpu_custom_call.1} parent=11 // pred_fallthru
        _
      // Predicated region
      $region25: #{tpu_custom_call.1} parent=11 // pred_check
        %p275 = pneg %p174
      $region26: #{tpu_custom_call.1} parent=11 // pred_check_branch
        %277 = sbr.rel (%p275) target = $region28
      $region27: #{tpu_custom_call.1} parent=11 // pred_region
        _
      $region28: #{tpu_custom_call.1} parent=11 // pred_fallthru
        _
      // Predicated region
      $region29: #{tpu_custom_call.1} parent=11 // pred_check
        %p278 = pneg %p195
      $region30: #{tpu_custom_call.1} parent=11 // pred_check_branch
        %280 = sbr.rel (%p278) target = $region32
      $region31: #{tpu_custom_call.1} parent=11 // pred_region
        _
      $region32: #{tpu_custom_call.1} parent=11 // pred_fallthru
        _
    $region12: #{tpu_custom_call.1} parent=5 // pred_fallthru
      _
    %p281 = scmp.lt.s32.totalorder %s24, 2
    // Predicated region
    $region33: #{tpu_custom_call.1} parent=5 // pred_check
      %p282 = pneg %p281
    $region34: #{tpu_custom_call.1} parent=5 // pred_check_branch
      %284 = sbr.rel (%p282) target = $region36
    $region35: #{tpu_custom_call.1} parent=5 // pred_region
      // Predicated region
      $region37: #{tpu_custom_call.1} parent=35 // pred_check
        %p285 = pneg %p58
      $region38: #{tpu_custom_call.1} parent=35 // pred_check_branch
        %287 = sbr.rel (%p285) target = $region40
      $region39: #{tpu_custom_call.1} parent=35 // pred_region
        %p288 = scmp.lt.s32.totalorder %s31, 1
        %s289 = scalar_select %p288, %s31, 1
        %p290 = scmp.lt.s32.totalorder %s32, 0
        %s291 = scalar_select %p290, %s32, 0
        %s292 = sadd.s32 %s291, %s289
        %s293 = smul.addr %s292, 8
        %s294 = scalar_lea.vmem %s1, %s293
      $region40: #{tpu_custom_call.1} parent=35 // pred_fallthru
        _
      // Predicated region
      $region41: #{tpu_custom_call.1} parent=35 // pred_check
        %p295 = pneg %p84
      $region42: #{tpu_custom_call.1} parent=35 // pred_check_branch
        %297 = sbr.rel (%p295) target = $region44
      $region43: #{tpu_custom_call.1} parent=35 // pred_region
        %p298 = scmp.lt.s32.totalorder %s31, 1
        %s299 = scalar_select %p298, %s31, 1
        %s300 = smul.addr %s299, 8
        %s301 = scalar_lea.vmem %s2, %s300
      $region44: #{tpu_custom_call.1} parent=35 // pred_fallthru
        _
    $region36: #{tpu_custom_call.1} parent=5 // pred_fallthru
      _
    %p302 = scmp.le.s32.totalorder 1, %s24
    %p303 = scmp.lt.s32.totalorder %s24, 3
    %p304 = pnand %p302, %p303
    %p305 = pneg %p304
    // Predicated region
    $region45: #{tpu_custom_call.1} parent=5 // pred_check
      _
    $region46: #{tpu_custom_call.1} parent=5 // pred_check_branch
      %307 = sbr.rel (%p304) target = $region48
    $region47: #{tpu_custom_call.1} parent=5 // pred_region
      %s308 = ssub.s32 %s24, 1
      %p309 = scmp.lt.s32.totalorder %s33, 1
      %s310 = scalar_select %p309, %s33, 1
      %p311 = scmp.lt.s32.totalorder %s34, 0
      %s312 = scalar_select %p311, %s34, 0
      %s313 = sadd.s32 %s312, %s310
      %s314 = smul.addr %s313, 8
      %s315 = scalar_lea.vmem %s1, %s314
      %p316 = pneg %p64
      %p317 = pneg %p61
      %p318 = scmp.lt.s32.totalorder %s33, 1
      %s319 = scalar_select %p318, %s33, 1
      %s320 = smul.addr %s319, 8
      %s321 = scalar_lea.vmem %s2, %s320
      %p322 = pneg %p90
      %p323 = pneg %p87
      %p324 = pneg %p111
      %p325 = pneg %p108
      %p326 = pneg %p132
      %p327 = pneg %p129
      %p328 = pneg %p153
      %p329 = pneg %p150
      %p330 = pneg %p174
      %p331 = pneg %p171
      %p332 = pneg %p195
      %p333 = pneg %p192
      %p334 = pneg %p223
      %p335 = pneg %p220
      %p336 = scmp.lt.s32.totalorder %s33, 1
      %s337 = scalar_select %p336, %s33, 1
      %p338 = scmp.lt.s32.totalorder %s34, 0
      %s339 = scalar_select %p338, %s34, 0
      %s340 = sadd.s32 %s339, %s337
      %s341 = smul.addr %s340, 8
      %s342 = scalar_lea.vmem %s8, %s341
      %p343 = pneg %p251
      %p344 = pneg %p248
      %p345 = scmp.lt.s32.totalorder %s33, 1
      %s346 = scalar_select %p345, %s33, 1
      %p347 = scmp.lt.s32.totalorder %s34, 0
      %s348 = scalar_select %p347, %s34, 0
      %s349 = sadd.s32 %s348, %s346
      %s350 = smul.addr %s349, 8
      %s351 = scalar_lea.vmem %s9, %s350
      %p352 = scmp.lt.s32.totalorder %s33, 1
      %s353 = scalar_select %p352, %s33, 1
      %p354 = scmp.lt.s32.totalorder %s34, 0
      %s355 = scalar_select %p354, %s34, 0
      %s356 = sadd.s32 %s355, %s353
      %s357 = smul.addr %s356, 8
      %s358 = scalar_lea.vmem %s1, %s357
      %p359 = scmp.lt.s32.totalorder %s33, 1
      %s360 = scalar_select %p359, %s33, 1
      %s361 = smul.addr %s360, 8
      %s362 = scalar_lea.vmem %s2, %s361
      %p363 = scmp.lt.s32.totalorder %s33, 1
      %s364 = scalar_select %p363, %s33, 1
      %p365 = scmp.lt.s32.totalorder %s34, 0
      %s366 = scalar_select %p365, %s34, 0
      %s367 = sadd.s32 %s366, %s364
      %s368 = smul.addr %s367, 8
      %s369 = scalar_lea.vmem %s8, %s368
      %p370 = scmp.lt.s32.totalorder %s33, 1
      %s371 = scalar_select %p370, %s33, 1
      %p372 = scmp.lt.s32.totalorder %s34, 0
      %s373 = scalar_select %p372, %s34, 0
      %s374 = sadd.s32 %s373, %s371
      %s375 = smul.addr %s374, 8
      %s376 = scalar_lea.vmem %s9, %s375
      %v377 = vlaneseq
      %v378 = vand.u32 %v377, 127
      %p379 = scmp.eq.s32.totalorder %s34, 0
      // Predicated region
      $region49: #{tpu_custom_call.1} parent=47 // pred_check
        %p380 = pneg %p379
      $region50: #{tpu_custom_call.1} parent=47 // pred_check_branch
        %382 = sbr.rel (%p380) target = $region52
      $region51: #{tpu_custom_call.1} parent=47 // pred_region
        %v383 = vld [vmem:[%s362] sm:$0x1f]
        %v384 = vld [vmem:[%s4] sm:$0xff]
        %v385 = vld [vmem:[%s4 + $0x8] sm:$0xff]
        %v386 = vld [vmem:[%s4 + $0x10] sm:$0xff]
        %v387 = vld [vmem:[%s4 + $0x18] sm:$0xff]
        %v388 = vld [vmem:[%s5] sm:$0x1]
        %v390 = vperm.slane %v388, 0
        %vm392 = vcmask 261120
        %v394 = vsel %vm392, %v383, 0
        %396 = vmatpush.msra.mxu0 0.0
        %397 = vmatpush.msra.mxu0 0.0
        %398 = vmatpush.msra.mxu0 0.0
        %399 = vmatpush.msra.mxu0 0.0
        %400 = vmatpush.msra.mxu0 0.0
        %401 = vmatpush.msra.mxu0 0.0
        %402 = vmatpush.msra.mxu0 0.0
        %403 = vmatpush.msra.mxu0 0.0
        %404 = vmatpush.msra.mxu0 0.0
        %405 = vmatpush.msra.mxu0 0.0
        %406 = vmatpush.msra.mxu0 0.0
        %407 = vmatpush.msra.mxu0 0.0
        %408 = vmatpush.msra.mxu0 %v387
        %409 = vmatpush.msra.mxu0 %v386
        %410 = vmatpush.msra.mxu0 %v385
        %411 = vmatpush.msra.mxu0 %v384
        %412 = vmatmul.f32.gmra.mxu0 %v394
        %v413 = vpop.f32.mrf.mxu0
        %v414 = vadd.f32 %v390, %v413
        %415 = vdwg.mxu0
        %vm416 = vcmask 258048
        %417 = vst.msk [vmem:[#allocation2] sm:$0x1f] %vm416, %v414
        %s418 = smul.u32 %s33, 128
        %s419 = sld [smem:[#allocation5 + %s418]]
        %v420 = vstv %s419
        %vm421 = vcmp.eq.s32.totalorder %v378, %v420
        %v422 = vsel %vm421, 1, 0
        %v423 = vcvt.s32.f32 %v422
        %vm424 = vcmask 319488
        %425 = vst.msk [vmem:[#allocation3] sm:$0x1] %vm424, %v423
        %s426 = sadd.s32 %s418, 1
        %s427 = sld [smem:[#allocation5 + %s426]]
        %v428 = vstv %s427
        %vm429 = vcmp.eq.s32.totalorder %v378, %v428
        %v430 = vsel %vm429, 1, 0
        %v431 = vcvt.s32.f32 %v430
        %432 = vst.msk [vmem:[#allocation3 + $0x1] sm:$0x1] %vm424, %v431
        %s433 = sadd.s32 %s418, 2
        %s434 = sld [smem:[#allocation5 + %s433]]
        %v435 = vstv %s434
        %vm436 = vcmp.eq.s32.totalorder %v378, %v435
        %v437 = vsel %vm436, 1, 0
        %v438 = vcvt.s32.f32 %v437
        %439 = vst.msk [vmem:[#allocation3 + $0x2] sm:$0x1] %vm424, %v438
        %s440 = sadd.s32 %s418, 3
        %s441 = sld [smem:[#allocation5 + %s440]]
        %v442 = vstv %s441
        %vm443 = vcmp.eq.s32.totalorder %v378, %v442
        %v444 = vsel %vm443, 1, 0
        %v445 = vcvt.s32.f32 %v444
        %446 = vst.msk [vmem:[#allocation3 + $0x3] sm:$0x1] %vm424, %v445
        %447 = vst.msk [vmem:[#allocation3 + $0x4] sm:$0x1] %vm424, 0.0
      $region52: #{tpu_custom_call.1} parent=47 // pred_fallthru
        _
      %v448 = vld [vmem:[%s358] sm:$0xff]
      %v449 = vld [vmem:[%s3] sm:$0xff]
      %v450 = vld [vmem:[%s3 + $0x8] sm:$0xff]
      %v451 = vld [vmem:[%s3 + $0x10] sm:$0xff]
      %v452 = vld [vmem:[%s3 + $0x18] sm:$0xff]
      %v453 = vld [vmem:[%s3 + $0x20] sm:$0xff]
      %v454 = vld [vmem:[%s3 + $0x28] sm:$0xff]
      %v455 = vld [vmem:[%s3 + $0x30] sm:$0xff]
      %v456 = vld [vmem:[%s3 + $0x38] sm:$0xff]
      %vm457 = vcmask 523264
      %v459 = vsel %vm457, %v448, 0
      %461 = vmatpush.msra.mxu0 0.0
      %462 = vmatpush.msra.mxu0 0.0
      %463 = vmatpush.msra.mxu0 0.0
      %464 = vmatpush.msra.mxu0 0.0
      %465 = vmatpush.msra.mxu0 0.0
      %466 = vmatpush.msra.mxu0 0.0
      %467 = vmatpush.msra.mxu0 0.0
      %468 = vmatpush.msra.mxu0 0.0
      %469 = vmatpush.msra.mxu0 %v456
      %470 = vmatpush.msra.mxu0 %v455
      %471 = vmatpush.msra.mxu0 %v454
      %472 = vmatpush.msra.mxu0 %v453
      %473 = vmatpush.msra.mxu0 %v452
      %474 = vmatpush.msra.mxu0 %v451
      %475 = vmatpush.msra.mxu0 %v450
      %476 = vmatpush.msra.mxu0 %v449
      %477 = vmatmul.f32.gmra.mxu0 %v459
      %v478 = vpop.f32.mrf.mxu0
      %v479 = vadd.f32 0.0, %v478
      %480 = vdwg.mxu0
      %v481 = vld [vmem:[#allocation2] sm:$0x1f]
      %v483 = vrot.slane %v481, 1
      %v484 = vrot.slane %v481, 2
      %v485 = vrot.slane %v481, 3
      %v486 = vrot.slane %v481, 4
      %v487 = vperm.slane %v481, 0
      %v488 = vperm.slane %v483, 0
      %v489 = vperm.slane %v484, 0
      %v490 = vperm.slane %v485, 0
      %v491 = vperm.slane %v486, 0
      %v497 = vadd.f32 %v487, %v479
      %v498 = vadd.f32 %v488, %v479
      %v499 = vadd.f32 %v489, %v479
      %v500 = vadd.f32 %v490, %v479
      %v501 = vadd.f32 %v491, %v479
      %v502 = vtanh.pop %v497
      %v503 = vtanh.pop %v498
      %v504 = vtanh.pop %v499
      %v505 = vtanh.pop %v500
      %v506 = vtanh.pop %v501
      %v507 = vld [vmem:[%s6] sm:$0xff]
      %v508 = vld [vmem:[%s6 + $0x8] sm:$0xff]
      %v509 = vld [vmem:[%s6 + $0x10] sm:$0xff]
      %v510 = vld [vmem:[%s6 + $0x18] sm:$0xff]
      %v511 = vld [vmem:[%s7] sm:$0x1]
      %v513 = vperm.slane %v511, 0
      %vm515 = vcmask 261120
      %v517 = vsel %vm515, %v502, 0
      %v520 = vsel %vm515, %v503, 0
      %v523 = vsel %vm515, %v504, 0
      %v526 = vsel %vm515, %v505, 0
      %v529 = vsel %vm515, %v506, 0
      %531 = vmatpush.msra.mxu0 0.0
      %532 = vmatpush.msra.mxu0 0.0
      %533 = vmatpush.msra.mxu0 0.0
      %534 = vmatpush.msra.mxu0 0.0
      %535 = vmatpush.msra.mxu0 0.0
      %536 = vmatpush.msra.mxu0 0.0
      %537 = vmatpush.msra.mxu0 0.0
      %538 = vmatpush.msra.mxu0 0.0
      %539 = vmatpush.msra.mxu0 0.0
      %540 = vmatpush.msra.mxu0 0.0
      %541 = vmatpush.msra.mxu0 0.0
      %542 = vmatpush.msra.mxu0 0.0
      %543 = vmatpush.msra.mxu0 %v510
      %544 = vmatpush.msra.mxu0 %v509
      %545 = vmatpush.msra.mxu0 %v508
      %546 = vmatpush.msra.mxu0 %v507
      %547 = vmatmul.f32.gmra.mxu0 %v517
      %v548 = vpop.f32.mrf.mxu0
      %v549 = vadd.f32 %v513, %v548
      %550 = vmatmul.f32.gmra.mxu0 %v520
      %v551 = vpop.f32.mrf.mxu0
      %v552 = vadd.f32 %v513, %v551
      %553 = vmatmul.f32.gmra.mxu0 %v523
      %v554 = vpop.f32.mrf.mxu0
      %v555 = vadd.f32 %v513, %v554
      %556 = vmatmul.f32.gmra.mxu0 %v526
      %v557 = vpop.f32.mrf.mxu0
      %v558 = vadd.f32 %v513, %v557
      %559 = vmatmul.f32.gmra.mxu0 %v529
      %v560 = vpop.f32.mrf.mxu0
      %v561 = vadd.f32 %v513, %v560
      %562 = vdwg.mxu0
      %vm563 = vcmask 326656
      %v564 = vsel %vm563, %v549, -inf
      %565 = vmax.xlane.f32.xlu0 %v564
      %v566 = vpop.xlane.xlu0 %565
      %v567 = vsel %vm563, %v552, -inf
      %568 = vmax.xlane.f32.xlu0 %v567
      %v569 = vpop.xlane.xlu0 %568
      %v570 = vsel %vm563, %v555, -inf
      %571 = vmax.xlane.f32.xlu0 %v570
      %v572 = vpop.xlane.xlu0 %571
      %v573 = vsel %vm563, %v558, -inf
      %574 = vmax.xlane.f32.xlu0 %v573
      %v575 = vpop.xlane.xlu0 %574
      %v576 = vsel %vm563, %v561, -inf
      %577 = vmax.xlane.f32.xlu0 %v576
      %v578 = vpop.xlane.xlu0 %577
      %v579 = vsub.f32 %v549, %v566
      %v580 = vsub.f32 %v552, %v569
      %v581 = vsub.f32 %v555, %v572
      %v582 = vsub.f32 %v558, %v575
      %v583 = vsub.f32 %v561, %v578
      %v584 = vmul.f32 %v579, 1.442695
      %v585 = vpow.pop %v584
      %v586 = vmul.f32 %v580, 1.442695
      %v587 = vpow.pop %v586
      %v588 = vmul.f32 %v581, 1.442695
      %v589 = vpow.pop %v588
      %v590 = vmul.f32 %v582, 1.442695
      %v591 = vpow.pop %v590
      %v592 = vmul.f32 %v583, 1.442695
      %v593 = vpow.pop %v592
      %v594 = vsel %vm563, %v585, 0.0
      %595 = vadd.xlane.f32.xlu0 %v594
      %v596 = vpop.xlane.xlu0 %595
      %v597 = vsel %vm563, %v587, 0.0
      %598 = vadd.xlane.f32.xlu0 %v597
      %v599 = vpop.xlane.xlu0 %598
      %v600 = vsel %vm563, %v589, 0.0
      %601 = vadd.xlane.f32.xlu0 %v600
      %v602 = vpop.xlane.xlu0 %601
      %v603 = vsel %vm563, %v591, 0.0
      %604 = vadd.xlane.f32.xlu0 %v603
      %v605 = vpop.xlane.xlu0 %604
      %v606 = vsel %vm563, %v593, 0.0
      %607 = vadd.xlane.f32.xlu0 %v606
      %v608 = vpop.xlane.xlu0 %607
      %v609 = vlog2.pop %v596
      %v610 = vmul.f32 %v609, 0.6931472
      %v611 = vlog2.pop %v599
      %v612 = vmul.f32 %v611, 0.6931472
      %v613 = vlog2.pop %v602
      %v614 = vmul.f32 %v613, 0.6931472
      %v615 = vlog2.pop %v605
      %v616 = vmul.f32 %v615, 0.6931472
      %v617 = vlog2.pop %v608
      %v618 = vmul.f32 %v617, 0.6931472
      %v619 = vsub.f32 %v579, %v610
      %v620 = vsub.f32 %v580, %v612
      %v621 = vsub.f32 %v581, %v614
      %v622 = vsub.f32 %v582, %v616
      %v623 = vsub.f32 %v583, %v618
      %v624 = vld [vmem:[#allocation3] sm:$0x1f]
      %v626 = vrot.slane %v624, 1
      %v627 = vrot.slane %v624, 2
      %v628 = vrot.slane %v624, 3
      %v629 = vrot.slane %v624, 4
      %v630 = vperm.slane %v624, 0
      %v631 = vperm.slane %v626, 0
      %v632 = vperm.slane %v627, 0
      %v633 = vperm.slane %v628, 0
      %v634 = vperm.slane %v629, 0
      %v640 = vmul.f32 %v579, %v630
      %v641 = vmul.f32 %v580, %v631
      %v642 = vmul.f32 %v581, %v632
      %v643 = vmul.f32 %v582, %v633
      %v644 = vmul.f32 %v583, %v634
      %v645 = vsel %vm563, %v640, 0.0
      %646 = vadd.xlane.f32.xlu0 %v645
      %v647 = vpop.xlane.xlu0 %646
      %v648 = vsel %vm563, %v641, 0.0
      %649 = vadd.xlane.f32.xlu0 %v648
      %v650 = vpop.xlane.xlu0 %649
      %v651 = vsel %vm563, %v642, 0.0
      %652 = vadd.xlane.f32.xlu0 %v651
      %v653 = vpop.xlane.xlu0 %652
      %v654 = vsel %vm563, %v643, 0.0
      %655 = vadd.xlane.f32.xlu0 %v654
      %v656 = vpop.xlane.xlu0 %655
      %v657 = vsel %vm563, %v644, 0.0
      %658 = vadd.xlane.f32.xlu0 %v657
      %v659 = vpop.xlane.xlu0 %658
      %v660 = vsub.f32 %v647, %v610
      %v661 = vsub.f32 %v650, %v612
      %v662 = vsub.f32 %v653, %v614
      %v663 = vsub.f32 %v656, %v616
      %v664 = vsub.f32 %v659, %v618
      %vm665 = vcmask 7168
      %666 = vst.msk [vmem:[%s369] sm:$0xff] %vm665, %v619
      %667 = vst.msk [vmem:[%s376] sm:$0xff] %vm665, %v660
      %669 = vrot.lane.b32.xlu0 %v620, 1
      %v670 = vpop.permute.xlu0 %669
      %vm672 = vcmask 15368
      %673 = vst.msk [vmem:[%s369] sm:$0xff] %vm672, %v670
      %674 = vst.msk [vmem:[%s376] sm:$0xff] %vm672, %v661
      %676 = vrot.lane.b32.xlu0 %v621, 2
      %v677 = vpop.permute.xlu0 %676
      %vm679 = vcmask 23568
      %680 = vst.msk [vmem:[%s369] sm:$0xff] %vm679, %v677
      %681 = vst.msk [vmem:[%s376] sm:$0xff] %vm679, %v662
      %683 = vrot.lane.b32.xlu0 %v622, 3
      %v684 = vpop.permute.xlu0 %683
      %vm686 = vcmask 31768
      %687 = vst.msk [vmem:[%s369] sm:$0xff] %vm686, %v684
      %688 = vst.msk [vmem:[%s376] sm:$0xff] %vm686, %v663
      %690 = vrot.lane.b32.xlu0 %v623, 4
      %v691 = vpop.permute.xlu0 %690
      %vm693 = vcmask 39968
      %694 = vst.msk [vmem:[%s369] sm:$0xff] %vm693, %v691
      %695 = vst.msk [vmem:[%s376] sm:$0xff] %vm693, %v664
      %p696 = scmp.lt.s32.totalorder %s33, 1
      %s697 = scalar_select %p696, %s33, 1
      %p698 = scmp.lt.s32.totalorder %s34, 0
      %s699 = scalar_select %p698, %s34, 0
      %s700 = sadd.s32 %s699, %s697
      %s701 = smul.addr %s700, 8
      %s702 = scalar_lea.vmem %s8, %s701
      %p703 = scmp.lt.s32.totalorder %s33, 1
      %s704 = scalar_select %p703, %s33, 1
      %p705 = scmp.lt.s32.totalorder %s34, 0
      %s706 = scalar_select %p705, %s34, 0
      %s707 = sadd.s32 %s706, %s704
      %s708 = smul.addr %s707, 8
      %s709 = scalar_lea.vmem %s9, %s708
      // Predicated region
      $region53: #{tpu_custom_call.1} parent=47 // pred_check
        %p710 = pneg %p220
      $region54: #{tpu_custom_call.1} parent=47 // pred_check_branch
        %712 = sbr.rel (%p710) target = $region56
      $region55: #{tpu_custom_call.1} parent=47 // pred_region
        _
      $region56: #{tpu_custom_call.1} parent=47 // pred_fallthru
        _
      // Predicated region
      $region57: #{tpu_custom_call.1} parent=47 // pred_check
        %p713 = pneg %p248
      $region58: #{tpu_custom_call.1} parent=47 // pred_check_branch
        %715 = sbr.rel (%p713) target = $region60
      $region59: #{tpu_custom_call.1} parent=47 // pred_region
        _
      $region60: #{tpu_custom_call.1} parent=47 // pred_fallthru
        _
    $region48: #{tpu_custom_call.1} parent=5 // pred_fallthru
      _
    %p716 = scmp.le.s32.totalorder 2, %s24
    // Predicated region
    $region61: #{tpu_custom_call.1} parent=5 // pred_check
      %p717 = pneg %p716
    $region62: #{tpu_custom_call.1} parent=5 // pred_check_branch
      %719 = sbr.rel (%p717) target = $region64
    $region63: #{tpu_custom_call.1} parent=5 // pred_region
      %s720 = ssub.s32 %s24, 2
      // Predicated region
      $region65: #{tpu_custom_call.1} parent=63 // pred_check
        %p721 = pneg %p226
      $region66: #{tpu_custom_call.1} parent=63 // pred_check_branch
        %723 = sbr.rel (%p721) target = $region68
      $region67: #{tpu_custom_call.1} parent=63 // pred_region
        %p724 = scmp.lt.s32.totalorder %s35, 1
        %s725 = scalar_select %p724, %s35, 1
        %p726 = scmp.lt.s32.totalorder %s36, 0
        %s727 = scalar_select %p726, %s36, 0
        %s728 = sadd.s32 %s727, %s725
        %s729 = smul.addr %s728, 8
        %s730 = scalar_lea.vmem %s8, %s729
      $region68: #{tpu_custom_call.1} parent=63 // pred_fallthru
        _
      // Predicated region
      $region69: #{tpu_custom_call.1} parent=63 // pred_check
        %p731 = pneg %p254
      $region70: #{tpu_custom_call.1} parent=63 // pred_check_branch
        %733 = sbr.rel (%p731) target = $region72
      $region71: #{tpu_custom_call.1} parent=63 // pred_region
        %p734 = scmp.lt.s32.totalorder %s35, 1
        %s735 = scalar_select %p734, %s35, 1
        %p736 = scmp.lt.s32.totalorder %s36, 0
        %s737 = scalar_select %p736, %s36, 0
        %s738 = sadd.s32 %s737, %s735
        %s739 = smul.addr %s738, 8
        %s740 = scalar_lea.vmem %s9, %s739
      $region72: #{tpu_custom_call.1} parent=63 // pred_fallthru
        _
    $region64: #{tpu_custom_call.1} parent=5 // pred_fallthru
      _
  $region6: #{tpu_custom_call.1} parent=0 // loop_footer
    %s28 = sadd.s32 1, %s24
  $region7: #{tpu_custom_call.1} parent=0 // loop_footer_branch
    %23 = sbr.rel target = $region3
  $region8: #{tpu_custom_call.1} parent=0 // loop_exit
    _

</llo_original>
